<compile_context>
chip_gen: v5e
topology: v5e:2x2
jax: 0.10.0
libtpu: 0.0.40
codegen_flags: <defaults>
</compile_context>

<pallas_src>
import functools

import jax
import jax.numpy as jnp
from jax.experimental import pallas as pl
from jax.experimental.pallas import tpu as pltpu

_LANE = 128


def _round_up(v, m):
    return (v + m - 1) // m * m


def _mlp_kernel(*refs):
    """refs = (x_ref, w0, b0, w1, b1, ..., wK, bK, out_ref).

    The Python loop over layers unrolls at trace time (layer count is static).
    ReLU follows every linear layer except the last, matching the
    nn.Sequential built by the PyTorch module.
    """
    x_ref = refs[0]
    out_ref = refs[-1]
    wb_refs = refs[1:-1]
    n_linear = len(wb_refs) // 2

    h = x_ref[...].astype(jnp.float32)               # activations stay f32
    for i in range(n_linear):
        w = wb_refs[2 * i][...]                      # bf16 (in_i, out_i), pre-transposed
        b = wb_refs[2 * i + 1][...]                  # f32  (1, out_i)
        # bf16 x bf16 on the MXU, f32 accumulation; bias add in f32 on the VPU.
        h = jnp.dot(h.astype(jnp.bfloat16), w,
                    preferred_element_type=jnp.float32) + b
        if i < n_linear - 1:
            h = jnp.maximum(h, 0.0)                  # fused ReLU (f32, VPU)
    out_ref[...] = h.astype(out_ref.dtype)


def mlp_forward(x, weights, biases, *, block_b=None, single_buffer_weights=True):
    """Pallas forward pass of the MLP.

    x          : (B, input_size) float32
    weights[i] : (in_i, out_i) bf16  -- already transposed relative to nn.Linear
    biases[i]  : (1, out_i)    f32
    """
    assert len(weights) == len(biases) and len(weights) >= 1
    B, in_dim = x.shape
    out_dim = weights[-1].shape[1]

    # Lane-dense output slab: pad the final layer's output features to a
    # multiple of 128 lanes (zero columns), slice back after the kernel.
    out_pad = max(_LANE, _round_up(out_dim, _LANE))
    weights = list(weights)
    biases = list(biases)
    if out_pad != out_dim:
        weights[-1] = jnp.pad(weights[-1], ((0, 0), (0, out_pad - out_dim)))
        biases[-1] = jnp.pad(biases[-1], ((0, 0), (0, out_pad - out_dim)))

    # Batch tiling: one program while small; >=2 tiles (v7x dual-TC sharding
    # via the "parallel" axis) and <=512-row tiles for large batches.
    if block_b is None:
        if B <= 256:
            block_b = B
        else:
            block_b = int(min(512, _round_up(pl.cdiv(B, 2), 8)))
    grid = (pl.cdiv(B, block_b),)

    w_pipe = pl.Buffered(1) if single_buffer_weights else None

    in_specs = [pl.BlockSpec((block_b, in_dim), lambda i: (i, 0))]
    for w, b in zip(weights, biases):
        # Constant index_map: the same weight/bias tile is resident for every
        # grid step; single-buffer it so it is not double-buffered pointlessly.
        in_specs.append(pl.BlockSpec(w.shape, lambda i: (0, 0),
                                     pipeline_mode=w_pipe))
        in_specs.append(pl.BlockSpec(b.shape, lambda i: (0, 0),
                                     pipeline_mode=w_pipe))
    out_spec = pl.BlockSpec((block_b, out_pad), lambda i: (i, 0))

    # Explicit VMEM budget: resident params + f32/bf16 activations + streamed
    # x/out double-buffers, with ~25% headroom, capped at v7x's 64 MiB.
    param_bytes = sum(int(w.size) * w.dtype.itemsize for w in weights)
    param_bytes += sum(int(b.size) * b.dtype.itemsize for b in biases)
    max_feat = max([in_dim] + [int(w.shape[1]) for w in weights])
    act_bytes = block_b * max_feat * (4 + 2)                 # f32 h + bf16 MXU copy
    io_bytes = (2 * block_b * in_dim * x.dtype.itemsize
                + 2 * block_b * out_pad * jnp.dtype(x.dtype).itemsize)
    vmem_needed = param_bytes + act_bytes + io_bytes
    vmem_limit = int(min(max(int(1.25 * vmem_needed), 32 * 1024 * 1024),
                         64 * 1024 * 1024))
    # TODO(synk): if param_bytes ever exceeds ~40-48 MiB (v7x has 64 MiB VMEM),
    # switch to a K/N-tiled fallback (extra "arbitrary" grid axis + f32
    # accumulator) instead of keeping every weight fully resident.

    flops = 2 * B * sum(int(w.shape[0]) * int(w.shape[1]) for w in weights)
    bytes_accessed = (int(x.size) * x.dtype.itemsize
                      + param_bytes
                      + B * out_pad * jnp.dtype(x.dtype).itemsize)

    flat_params = [t for wb in zip(weights, biases) for t in wb]

    out_padded = pl.pallas_call(
        _mlp_kernel,
        out_shape=jax.ShapeDtypeStruct((B, out_pad), x.dtype),
        grid_spec=pltpu.PrefetchScalarGridSpec(
            num_scalar_prefetch=0,
            grid=grid,
            in_specs=in_specs,
            out_specs=out_spec,
        ),
        compiler_params=pltpu.CompilerParams(
            dimension_semantics=("parallel",),
            vmem_limit_bytes=vmem_limit,
        ),
        cost_estimate=pl.CostEstimate(
            flops=flops, transcendentals=0, bytes_accessed=bytes_accessed),
    )(x, *flat_params)

    if out_pad != out_dim:
        return out_padded[:, :out_dim]
    return out_padded


def init_mlp_params(key, input_size, hidden_size, output_size, num_layers=1):
    """Build parameters matching the PyTorch MLP layer structure.

    Weights are stored pre-transposed as (in, out) and cast to bf16 ONCE at
    init time (MXU-native on v5e/v6e/v7x, half the VMEM/HBM weight traffic);
    biases stay f32 so the bias-add/ReLU path stays f32.
    """
    assert num_layers >= 0
    if num_layers == 0:
        dims = [(input_size, output_size)]
    else:
        dims = [(input_size, hidden_size)]
        dims += [(hidden_size, hidden_size)] * (num_layers - 1)
        dims += [(hidden_size, output_size)]

    weights, biases = [], []
    for fan_in, fan_out in dims:
        key, kw, kb = jax.random.split(key, 3)
        bound = 1.0 / (fan_in ** 0.5)                # nn.Linear default init range
        w = jax.random.uniform(kw, (fan_in, fan_out), jnp.float32, -bound, bound)
        b = jax.random.uniform(kb, (1, fan_out), jnp.float32, -bound, bound)
        weights.append(w.astype(jnp.bfloat16))
        biases.append(b)
    return weights, biases


def _reference(x, weights, biases):
    """Pure-JAX replica of the kernel math (bf16 MXU operands, f32 accum)."""
    h = x.astype(jnp.float32)
    for i, (w, b) in enumerate(zip(weights, biases)):
        h = jnp.dot(h.astype(jnp.bfloat16), w.astype(jnp.bfloat16),
                    preferred_element_type=jnp.float32) + b.astype(jnp.float32)
        if i < len(weights) - 1:
            h = jnp.maximum(h, 0.0)
    return h


if __name__ == "__main__":
    # Small shapes consistent with the module.
    B, INPUT, HIDDEN, OUTPUT, NUM_LAYERS = 8, 32, 64, 16, 2

    key = jax.random.PRNGKey(0)
    key, kx = jax.random.split(key)
    weights, biases = init_mlp_params(key, INPUT, HIDDEN, OUTPUT, NUM_LAYERS)
    x = jax.random.normal(kx, (B, INPUT), jnp.float32)

    try:
        forward = jax.jit(functools.partial(mlp_forward, single_buffer_weights=True))
        y = forward(x, weights, biases)
        jax.block_until_ready(y)
    except Exception:
        # Fallback if this Pallas build rejects single-buffered constant tiles.
        forward = jax.jit(functools.partial(mlp_forward, single_buffer_weights=False))
        y = forward(x, weights, biases)
        jax.block_until_ready(y)

    y_ref = _reference(x, weights, biases)
    assert y.shape == (B, OUTPUT)
    assert jnp.allclose(y, y_ref, rtol=2e-2, atol=2e-2)

    print("KERNEL_OK")
</pallas_src>

<mosaic_0001>
module attributes {stable_mosaic.version = 11 : i64} {
  func.func @_mlp_kernel(%arg0: i32, %arg1: memref<8x32xf32, #tpu.memory_space<vmem>>, %arg2: memref<32x64xbf16, #tpu.memory_space<vmem>>, %arg3: memref<1x64xf32, #tpu.memory_space<vmem>>, %arg4: memref<64x64xbf16, #tpu.memory_space<vmem>>, %arg5: memref<1x64xf32, #tpu.memory_space<vmem>>, %arg6: memref<64x128xbf16, #tpu.memory_space<vmem>>, %arg7: memref<1x128xf32, #tpu.memory_space<vmem>>, %arg8: memref<8x128xf32, #tpu.memory_space<vmem>>) attributes {dimension_semantics = [#tpu.dimension_semantics<parallel>], iteration_bounds = array<i64: 1>, scalar_prefetch = 0 : i64, scratch_operands = 0 : i64, tpu.core_type = #tpu.core_type<tc>, window_params = [{transform_indices = @transform_0, window_bounds = array<i64: 8, 32>}, {pipeline_mode = #tpu.pipeline_mode<synchronous>, transform_indices = @transform_1, window_bounds = array<i64: 32, 64>}, {pipeline_mode = #tpu.pipeline_mode<synchronous>, transform_indices = @transform_2, window_bounds = array<i64: 1, 64>}, {pipeline_mode = #tpu.pipeline_mode<synchronous>, transform_indices = @transform_3, window_bounds = array<i64: 64, 64>}, {pipeline_mode = #tpu.pipeline_mode<synchronous>, transform_indices = @transform_4, window_bounds = array<i64: 1, 64>}, {pipeline_mode = #tpu.pipeline_mode<synchronous>, transform_indices = @transform_5, window_bounds = array<i64: 64, 128>}, {pipeline_mode = #tpu.pipeline_mode<synchronous>, transform_indices = @transform_6, window_bounds = array<i64: 1, 128>}, {transform_indices = @transform_7, window_bounds = array<i64: 8, 128>}]} {
    %c0 = arith.constant 0 : index
    %c0_0 = arith.constant 0 : index
    %0 = vector.load %arg1[%c0, %c0_0] : memref<8x32xf32, #tpu.memory_space<vmem>>, vector<8x32xf32>
    %c0_1 = arith.constant 0 : index
    %c0_2 = arith.constant 0 : index
    %1 = vector.load %arg2[%c0_1, %c0_2] : memref<32x64xbf16, #tpu.memory_space<vmem>>, vector<32x64xbf16>
    %c0_3 = arith.constant 0 : index
    %c0_4 = arith.constant 0 : index
    %2 = vector.load %arg3[%c0_3, %c0_4] : memref<1x64xf32, #tpu.memory_space<vmem>>, vector<1x64xf32>
    %3 = arith.truncf %0 : vector<8x32xf32> to vector<8x32xbf16>
    %cst = arith.constant dense<0.000000e+00> : vector<8x64xf32>
    %4 = tpu.matmul %3, %1, %cst {dimension_numbers = #tpu.dot_dimension_numbers<[1], [0], [0], [1], [0, 0, 1, 1], [], []>} : vector<8x32xbf16>, vector<32x64xbf16>, vector<8x64xf32> -> vector<8x64xf32>
    %5 = vector.broadcast %2 : vector<1x64xf32> to vector<8x64xf32>
    %6 = arith.addf %4, %5 : vector<8x64xf32>
    %cst_5 = arith.constant 0.000000e+00 : f32
    %7 = vector.broadcast %cst_5 : f32 to vector<8x64xf32>
    %8 = arith.maximumf %6, %7 : vector<8x64xf32>
    %c0_6 = arith.constant 0 : index
    %c0_7 = arith.constant 0 : index
    %9 = vector.load %arg4[%c0_6, %c0_7] : memref<64x64xbf16, #tpu.memory_space<vmem>>, vector<64x64xbf16>
    %c0_8 = arith.constant 0 : index
    %c0_9 = arith.constant 0 : index
    %10 = vector.load %arg5[%c0_8, %c0_9] : memref<1x64xf32, #tpu.memory_space<vmem>>, vector<1x64xf32>
    %11 = arith.truncf %8 : vector<8x64xf32> to vector<8x64xbf16>
    %cst_10 = arith.constant dense<0.000000e+00> : vector<8x64xf32>
    %12 = tpu.matmul %11, %9, %cst_10 {dimension_numbers = #tpu.dot_dimension_numbers<[1], [0], [0], [1], [0, 0, 1, 1], [], []>} : vector<8x64xbf16>, vector<64x64xbf16>, vector<8x64xf32> -> vector<8x64xf32>
    %13 = vector.broadcast %10 : vector<1x64xf32> to vector<8x64xf32>
    %14 = arith.addf %12, %13 : vector<8x64xf32>
    %cst_11 = arith.constant 0.000000e+00 : f32
    %15 = vector.broadcast %cst_11 : f32 to vector<8x64xf32>
    %16 = arith.maximumf %14, %15 : vector<8x64xf32>
    %c0_12 = arith.constant 0 : index
    %c0_13 = arith.constant 0 : index
    %17 = vector.load %arg6[%c0_12, %c0_13] : memref<64x128xbf16, #tpu.memory_space<vmem>>, vector<64x128xbf16>
    %c0_14 = arith.constant 0 : index
    %c0_15 = arith.constant 0 : index
    %18 = vector.load %arg7[%c0_14, %c0_15] : memref<1x128xf32, #tpu.memory_space<vmem>>, vector<1x128xf32>
    %19 = arith.truncf %16 : vector<8x64xf32> to vector<8x64xbf16>
    %cst_16 = arith.constant dense<0.000000e+00> : vector<8x128xf32>
    %20 = tpu.matmul %19, %17, %cst_16 {dimension_numbers = #tpu.dot_dimension_numbers<[1], [0], [0], [1], [0, 0, 1, 1], [], []>} : vector<8x64xbf16>, vector<64x128xbf16>, vector<8x128xf32> -> vector<8x128xf32>
    %21 = vector.broadcast %18 : vector<1x128xf32> to vector<8x128xf32>
    %22 = arith.addf %20, %21 : vector<8x128xf32>
    %c0_17 = arith.constant 0 : index
    %c0_18 = arith.constant 0 : index
    %23 = vector.load %arg8[%c0_17, %c0_18] : memref<8x128xf32, #tpu.memory_space<vmem>>, vector<8x128xf32>
    tpu.vector_store %arg8[%c0_17, %c0_18], %22 {strides = array<i32>} : memref<8x128xf32, #tpu.memory_space<vmem>>, vector<8x128xf32>,
    return
  }
  func.func @transform_0(%arg0: i32) -> (i32, i32) {
    %c0_i32 = arith.constant 0 : i32
    %c0_i32_0 = arith.constant 0 : i32
    return %arg0, %c0_i32 : i32, i32
  }
  func.func @transform_1(%arg0: i32) -> (i32, i32) {
    %c0_i32 = arith.constant 0 : i32
    %c0_i32_0 = arith.constant 0 : i32
    %c0_i32_1 = arith.constant 0 : i32
    return %c0_i32, %c0_i32_0 : i32, i32
  }
  func.func @transform_2(%arg0: i32) -> (i32, i32) {
    %c0_i32 = arith.constant 0 : i32
    %c0_i32_0 = arith.constant 0 : i32
    %c0_i32_1 = arith.constant 0 : i32
    return %c0_i32, %c0_i32_0 : i32, i32
  }
  func.func @transform_3(%arg0: i32) -> (i32, i32) {
    %c0_i32 = arith.constant 0 : i32
    %c0_i32_0 = arith.constant 0 : i32
    %c0_i32_1 = arith.constant 0 : i32
    return %c0_i32, %c0_i32_0 : i32, i32
  }
  func.func @transform_4(%arg0: i32) -> (i32, i32) {
    %c0_i32 = arith.constant 0 : i32
    %c0_i32_0 = arith.constant 0 : i32
    %c0_i32_1 = arith.constant 0 : i32
    return %c0_i32, %c0_i32_0 : i32, i32
  }
  func.func @transform_5(%arg0: i32) -> (i32, i32) {
    %c0_i32 = arith.constant 0 : i32
    %c0_i32_0 = arith.constant 0 : i32
    %c0_i32_1 = arith.constant 0 : i32
    return %c0_i32, %c0_i32_0 : i32, i32
  }
  func.func @transform_6(%arg0: i32) -> (i32, i32) {
    %c0_i32 = arith.constant 0 : i32
    %c0_i32_0 = arith.constant 0 : i32
    %c0_i32_1 = arith.constant 0 : i32
    return %c0_i32, %c0_i32_0 : i32, i32
  }
  func.func @transform_7(%arg0: i32) -> (i32, i32) {
    %c0_i32 = arith.constant 0 : i32
    %c0_i32_0 = arith.constant 0 : i32
    return %arg0, %c0_i32 : i32, i32
  }
}

module attributes {stable_mosaic.version = 11 : i64} {
  func.func @_mlp_kernel(%arg0: i32, %arg1: memref<8x32xf32, #tpu.memory_space<vmem>>, %arg2: memref<32x64xbf16, #tpu.memory_space<vmem>>, %arg3: memref<1x64xf32, #tpu.memory_space<vmem>>, %arg4: memref<64x64xbf16, #tpu.memory_space<vmem>>, %arg5: memref<1x64xf32, #tpu.memory_space<vmem>>, %arg6: memref<64x128xbf16, #tpu.memory_space<vmem>>, %arg7: memref<1x128xf32, #tpu.memory_space<vmem>>, %arg8: memref<8x128xf32, #tpu.memory_space<vmem>>) attributes {dimension_semantics = [#tpu.dimension_semantics<parallel>], iteration_bounds = array<i64: 1>, scalar_prefetch = 0 : i64, scratch_operands = 0 : i64, tpu.core_type = #tpu.core_type<tc>, window_params = [{transform_indices = @transform_0, window_bounds = array<i64: 8, 32>}, {pipeline_mode = #tpu.pipeline_mode<synchronous>, transform_indices = @transform_1, window_bounds = array<i64: 32, 64>}, {pipeline_mode = #tpu.pipeline_mode<synchronous>, transform_indices = @transform_2, window_bounds = array<i64: 1, 64>}, {pipeline_mode = #tpu.pipeline_mode<synchronous>, transform_indices = @transform_3, window_bounds = array<i64: 64, 64>}, {pipeline_mode = #tpu.pipeline_mode<synchronous>, transform_indices = @transform_4, window_bounds = array<i64: 1, 64>}, {pipeline_mode = #tpu.pipeline_mode<synchronous>, transform_indices = @transform_5, window_bounds = array<i64: 64, 128>}, {pipeline_mode = #tpu.pipeline_mode<synchronous>, transform_indices = @transform_6, window_bounds = array<i64: 1, 128>}, {transform_indices = @transform_7, window_bounds = array<i64: 8, 128>}]} {
    %c0 = arith.constant 0 : index
    %c0_0 = arith.constant 0 : index
    %0 = vector.load %arg1[%c0, %c0_0] : memref<8x32xf32, #tpu.memory_space<vmem>>, vector<8x32xf32>
    %c0_1 = arith.constant 0 : index
    %c0_2 = arith.constant 0 : index
    %1 = vector.load %arg2[%c0_1, %c0_2] : memref<32x64xbf16, #tpu.memory_space<vmem>>, vector<32x64xbf16>
    %c0_3 = arith.constant 0 : index
    %c0_4 = arith.constant 0 : index
    %2 = vector.load %arg3[%c0_3, %c0_4] : memref<1x64xf32, #tpu.memory_space<vmem>>, vector<1x64xf32>
    %3 = arith.truncf %0 : vector<8x32xf32> to vector<8x32xbf16>
    %cst = arith.constant dense<0.000000e+00> : vector<8x64xf32>
    %4 = tpu.matmul %3, %1, %cst {dimension_numbers = #tpu.dot_dimension_numbers<[1], [0], [0], [1], [0, 0, 1, 1], [], []>} : vector<8x32xbf16>, vector<32x64xbf16>, vector<8x64xf32> -> vector<8x64xf32>
    %5 = vector.broadcast %2 : vector<1x64xf32> to vector<8x64xf32>
    %6 = arith.addf %4, %5 : vector<8x64xf32>
    %cst_5 = arith.constant 0.000000e+00 : f32
    %7 = vector.broadcast %cst_5 : f32 to vector<8x64xf32>
    %8 = arith.maximumf %6, %7 : vector<8x64xf32>
    %c0_6 = arith.constant 0 : index
    %c0_7 = arith.constant 0 : index
    %9 = vector.load %arg4[%c0_6, %c0_7] : memref<64x64xbf16, #tpu.memory_space<vmem>>, vector<64x64xbf16>
    %c0_8 = arith.constant 0 : index
    %c0_9 = arith.constant 0 : index
    %10 = vector.load %arg5[%c0_8, %c0_9] : memref<1x64xf32, #tpu.memory_space<vmem>>, vector<1x64xf32>
    %11 = arith.truncf %8 : vector<8x64xf32> to vector<8x64xbf16>
    %cst_10 = arith.constant dense<0.000000e+00> : vector<8x64xf32>
    %12 = tpu.matmul %11, %9, %cst_10 {dimension_numbers = #tpu.dot_dimension_numbers<[1], [0], [0], [1], [0, 0, 1, 1], [], []>} : vector<8x64xbf16>, vector<64x64xbf16>, vector<8x64xf32> -> vector<8x64xf32>
    %13 = vector.broadcast %10 : vector<1x64xf32> to vector<8x64xf32>
    %14 = arith.addf %12, %13 : vector<8x64xf32>
    %cst_11 = arith.constant 0.000000e+00 : f32
    %15 = vector.broadcast %cst_11 : f32 to vector<8x64xf32>
    %16 = arith.maximumf %14, %15 : vector<8x64xf32>
    %c0_12 = arith.constant 0 : index
    %c0_13 = arith.constant 0 : index
    %17 = vector.load %arg6[%c0_12, %c0_13] : memref<64x128xbf16, #tpu.memory_space<vmem>>, vector<64x128xbf16>
    %c0_14 = arith.constant 0 : index
    %c0_15 = arith.constant 0 : index
    %18 = vector.load %arg7[%c0_14, %c0_15] : memref<1x128xf32, #tpu.memory_space<vmem>>, vector<1x128xf32>
    %19 = arith.truncf %16 : vector<8x64xf32> to vector<8x64xbf16>
    %cst_16 = arith.constant dense<0.000000e+00> : vector<8x128xf32>
    %20 = tpu.matmul %19, %17, %cst_16 {dimension_numbers = #tpu.dot_dimension_numbers<[1], [0], [0], [1], [0, 0, 1, 1], [], []>} : vector<8x64xbf16>, vector<64x128xbf16>, vector<8x128xf32> -> vector<8x128xf32>
    %21 = vector.broadcast %18 : vector<1x128xf32> to vector<8x128xf32>
    %22 = arith.addf %20, %21 : vector<8x128xf32>
    %c0_17 = arith.constant 0 : index
    %c0_18 = arith.constant 0 : index
    %23 = vector.load %arg8[%c0_17, %c0_18] : memref<8x128xf32, #tpu.memory_space<vmem>>, vector<8x128xf32>
    tpu.vector_store %arg8[%c0_17, %c0_18], %22 {strides = array<i32>} : memref<8x128xf32, #tpu.memory_space<vmem>>, vector<8x128xf32>,
    return
  }
  func.func @transform_0(%arg0: i32) -> (i32, i32) {
    %c0_i32 = arith.constant 0 : i32
    %c0_i32_0 = arith.constant 0 : i32
    return %arg0, %c0_i32 : i32, i32
  }
  func.func @transform_1(%arg0: i32) -> (i32, i32) {
    %c0_i32 = arith.constant 0 : i32
    %c0_i32_0 = arith.constant 0 : i32
    %c0_i32_1 = arith.constant 0 : i32
    return %c0_i32, %c0_i32_0 : i32, i32
  }
  func.func @transform_2(%arg0: i32) -> (i32, i32) {
    %c0_i32 = arith.constant 0 : i32
    %c0_i32_0 = arith.constant 0 : i32
    %c0_i32_1 = arith.constant 0 : i32
    return %c0_i32, %c0_i32_0 : i32, i32
  }
  func.func @transform_3(%arg0: i32) -> (i32, i32) {
    %c0_i32 = arith.constant 0 : i32
    %c0_i32_0 = arith.constant 0 : i32
    %c0_i32_1 = arith.constant 0 : i32
    return %c0_i32, %c0_i32_0 : i32, i32
  }
  func.func @transform_4(%arg0: i32) -> (i32, i32) {
    %c0_i32 = arith.constant 0 : i32
    %c0_i32_0 = arith.constant 0 : i32
    %c0_i32_1 = arith.constant 0 : i32
    return %c0_i32, %c0_i32_0 : i32, i32
  }
  func.func @transform_5(%arg0: i32) -> (i32, i32) {
    %c0_i32 = arith.constant 0 : i32
    %c0_i32_0 = arith.constant 0 : i32
    %c0_i32_1 = arith.constant 0 : i32
    return %c0_i32, %c0_i32_0 : i32, i32
  }
  func.func @transform_6(%arg0: i32) -> (i32, i32) {
    %c0_i32 = arith.constant 0 : i32
    %c0_i32_0 = arith.constant 0 : i32
    %c0_i32_1 = arith.constant 0 : i32
    return %c0_i32, %c0_i32_0 : i32, i32
  }
  func.func @transform_7(%arg0: i32) -> (i32, i32) {
    %c0_i32 = arith.constant 0 : i32
    %c0_i32_0 = arith.constant 0 : i32
    return %arg0, %c0_i32 : i32, i32
  }
}

</mosaic_0001>

<llo_original>
// kernel: mlp_forward.1
$region0: #{mlp_forward.1}
  #allocation0 [shape = 'u32[]', space=smem, size = 0x4, offset = 0x4, fixed_abs, tag = 'smem constant byte address 0x4 - core index']
  #allocation1 [shape = 'u32[72,128]{1,0:T(1,128)}', space=vmem, size = 0x9000, scoped, tag = 'internal scratch']
  %s0 = inlined_call_operand.vmem [shape: f32[8,32], index: 0, kind: input, shape index: {}]
  %s1 = inlined_call_operand.vmem [shape: bf16[32,64], index: 1, kind: input, shape index: {}]
  %s2 = inlined_call_operand.vmem [shape: f32[1,64], index: 2, kind: input, shape index: {}]
  %s3 = inlined_call_operand.vmem [shape: bf16[64,64], index: 3, kind: input, shape index: {}]
  %s4 = inlined_call_operand.vmem [shape: f32[1,64], index: 4, kind: input, shape index: {}]
  %s5 = inlined_call_operand.vmem [shape: bf16[64,128], index: 5, kind: input, shape index: {}]
  %s6 = inlined_call_operand.vmem [shape: f32[1,128], index: 6, kind: input, shape index: {}]
  %s7 = inlined_call_operand.hbm [shape: f32[8,128], index: 7, kind: output, shape index: {}]
  %s8 = sld [smem:[#allocation0]]
  $region38: #{mlp_forward.1} parent=0
    _
  %s10 = ssub.s32 1, %s8
  %s11 = scalar_select 0, %s10, %s8
  $region1: #{mlp_forward.1} parent=0
    #allocation2 [shape = 'u8[4096]{0}', space=vmem, size = 0x1000, scoped, tag = 'output window, operand 0, single buffered']
    #allocation3 [shape = 's32[1]{0}', space=sflag, size = 0x4, scoped, tag = 'scoped memory for mlp_forward.1']
    %12 = vsyncpa [#allocation3], 0
    // Predicated region
    $region2: #{mlp_forward.1} parent=1 // pred_check
      _
    $region3: #{mlp_forward.1} parent=1 // pred_check_branch
      %14 = sbr.rel (0) target = $region5
    $region4: #{mlp_forward.1} parent=1 // pred_region
      _
    $region5: #{mlp_forward.1} parent=1 // pred_fallthru
      _
    // Predicated region
    $region6: #{mlp_forward.1} parent=1 // pred_check
      _
    $region7: #{mlp_forward.1} parent=1 // pred_check_branch
      %16 = sbr.rel (0) target = $region9
    $region8: #{mlp_forward.1} parent=1 // pred_region
      _
    $region9: #{mlp_forward.1} parent=1 // pred_fallthru
      _
    // Predicated region
    $region10: #{mlp_forward.1} parent=1 // pred_check
      _
    $region11: #{mlp_forward.1} parent=1 // pred_check_branch
      %18 = sbr.rel (0) target = $region13
    $region12: #{mlp_forward.1} parent=1 // pred_region
      _
    $region13: #{mlp_forward.1} parent=1 // pred_fallthru
      _
    // Predicated region
    $region14: #{mlp_forward.1} parent=1 // pred_check
      _
    $region15: #{mlp_forward.1} parent=1 // pred_check_branch
      %20 = sbr.rel (0) target = $region17
    $region16: #{mlp_forward.1} parent=1 // pred_region
      _
    $region17: #{mlp_forward.1} parent=1 // pred_fallthru
      _
    // Predicated region
    $region18: #{mlp_forward.1} parent=1 // pred_check
      _
    $region19: #{mlp_forward.1} parent=1 // pred_check_branch
      %22 = sbr.rel (0) target = $region21
    $region20: #{mlp_forward.1} parent=1 // pred_region
      _
    $region21: #{mlp_forward.1} parent=1 // pred_fallthru
      _
    // Predicated region
    $region22: #{mlp_forward.1} parent=1 // pred_check
      _
    $region23: #{mlp_forward.1} parent=1 // pred_check_branch
      %24 = sbr.rel (0) target = $region25
    $region24: #{mlp_forward.1} parent=1 // pred_region
      _
    $region25: #{mlp_forward.1} parent=1 // pred_fallthru
      _
    // Predicated region
    $region26: #{mlp_forward.1} parent=1 // pred_check
      _
    $region27: #{mlp_forward.1} parent=1 // pred_check_branch
      %26 = sbr.rel (0) target = $region29
    $region28: #{mlp_forward.1} parent=1 // pred_region
      _
    $region29: #{mlp_forward.1} parent=1 // pred_fallthru
      _
    %v28 = vld [vmem:[%s0] sm:$0xff]
    %v29 = vld [vmem:[%s1] sm:$0xf]
    %v30 = vld [vmem:[%s1 + $0x4] sm:$0xf]
    %v31 = vld [vmem:[%s1 + $0x8] sm:$0xf]
    %v32 = vld [vmem:[%s1 + $0xc] sm:$0xf]
    %v33 = vld [vmem:[%s2] sm:$0x1]
    %v34 = vpack.c.bf16 %v28, %v28
    %v36 = vperm.slane %v33, 0
    %v42 = vunpack.c.l.b16 %v29
    %v43 = vunpack.c.l.b16 %v30
    %v44 = vunpack.c.l.b16 %v31
    %v45 = vunpack.c.l.b16 %v32
    %v46 = vpack.c.b16 %v43, %v42
    %v47 = vpack.c.b16 %v45, %v44
    %vm50 = vcmask 261120
    %v52 = vsel %vm50, %v34, 0
    %54 = vmatpush.bf16.msra.mxu0 0
    %55 = vmatpush.bf16.msra.mxu0 0
    %56 = vmatpush.bf16.msra.mxu0 0
    %57 = vmatpush.bf16.msra.mxu0 0
    %58 = vmatpush.bf16.msra.mxu0 0
    %59 = vmatpush.bf16.msra.mxu0 0
    %60 = vmatpush.bf16.msra.mxu0 %v47
    %61 = vmatpush.bf16.msra.mxu0 %v46
    %62 = vmatmul.bf16.gmra.mxu0 %v52
    %v63 = vpop.f32.mrf.mxu0
    %v64 = vadd.f32 %v36, %v63
    %v65 = vpop.f32.mrf.mxu0
    %66 = vdwg.mxu0
    %v67 = vmax.f32 %v64, 0.0
    %v68 = vld [vmem:[%s3] sm:$0xf]
    %v69 = vld [vmem:[%s3 + $0x4] sm:$0xf]
    %v70 = vld [vmem:[%s3 + $0x8] sm:$0xf]
    %v71 = vld [vmem:[%s3 + $0xc] sm:$0xf]
    %v72 = vld [vmem:[%s3 + $0x10] sm:$0xf]
    %v73 = vld [vmem:[%s3 + $0x14] sm:$0xf]
    %v74 = vld [vmem:[%s3 + $0x18] sm:$0xf]
    %v75 = vld [vmem:[%s3 + $0x1c] sm:$0xf]
    %v76 = vld [vmem:[%s4] sm:$0x1]
    %v77 = vpack.c.bf16 %v67, %v67
    %v79 = vperm.slane %v76, 0
    %v89 = vunpack.c.l.b16 %v68
    %v90 = vunpack.c.l.b16 %v69
    %v91 = vunpack.c.l.b16 %v70
    %v92 = vunpack.c.l.b16 %v71
    %v93 = vunpack.c.l.b16 %v72
    %v94 = vunpack.c.l.b16 %v73
    %v95 = vunpack.c.l.b16 %v74
    %v96 = vunpack.c.l.b16 %v75
    %v97 = vpack.c.b16 %v90, %v89
    %v98 = vpack.c.b16 %v92, %v91
    %v99 = vpack.c.b16 %v94, %v93
    %v100 = vpack.c.b16 %v96, %v95
    %vm105 = vcmask 523264
    %v107 = vsel %vm105, %v77, 0
    %109 = vmatpush.bf16.msra.mxu0 0
    %110 = vmatpush.bf16.msra.mxu0 0
    %111 = vmatpush.bf16.msra.mxu0 0
    %112 = vmatpush.bf16.msra.mxu0 0
    %113 = vmatpush.bf16.msra.mxu0 %v100
    %114 = vmatpush.bf16.msra.mxu0 %v99
    %115 = vmatpush.bf16.msra.mxu0 %v98
    %116 = vmatpush.bf16.msra.mxu0 %v97
    %117 = vmatmul.bf16.gmra.mxu0 %v107
    %v118 = vpop.f32.mrf.mxu0
    %v119 = vadd.f32 %v79, %v118
    %v120 = vpop.f32.mrf.mxu0
    %121 = vdwg.mxu0
    %v122 = vmax.f32 %v119, 0.0
    %v123 = vld [vmem:[%s5] sm:$0xf]
    %v124 = vld [vmem:[%s5 + $0x4] sm:$0xf]
    %v125 = vld [vmem:[%s5 + $0x8] sm:$0xf]
    %v126 = vld [vmem:[%s5 + $0xc] sm:$0xf]
    %v127 = vld [vmem:[%s5 + $0x10] sm:$0xf]
    %v128 = vld [vmem:[%s5 + $0x14] sm:$0xf]
    %v129 = vld [vmem:[%s5 + $0x18] sm:$0xf]
    %v130 = vld [vmem:[%s5 + $0x1c] sm:$0xf]
    %v131 = vld [vmem:[%s6] sm:$0x1]
    %v132 = vpack.c.bf16 %v122, %v122
    %v134 = vperm.slane %v131, 0
    %v144 = vunpack.c.l.b16 %v123
    %v145 = vunpack.c.l.b16 %v124
    %v146 = vunpack.c.l.b16 %v125
    %v147 = vunpack.c.l.b16 %v126
    %v148 = vunpack.c.l.b16 %v127
    %v149 = vunpack.c.l.b16 %v128
    %v150 = vunpack.c.l.b16 %v129
    %v151 = vunpack.c.l.b16 %v130
    %v152 = vpack.c.b16 %v145, %v144
    %v153 = vpack.c.b16 %v147, %v146
    %v154 = vpack.c.b16 %v149, %v148
    %v155 = vpack.c.b16 %v151, %v150
    %v161 = vsel %vm105, %v132, 0
    %163 = vmatpush.bf16.msra.mxu0 0
    %164 = vmatpush.bf16.msra.mxu0 0
    %165 = vmatpush.bf16.msra.mxu0 0
    %166 = vmatpush.bf16.msra.mxu0 0
    %167 = vmatpush.bf16.msra.mxu0 %v155
    %168 = vmatpush.bf16.msra.mxu0 %v154
    %169 = vmatpush.bf16.msra.mxu0 %v153
    %170 = vmatpush.bf16.msra.mxu0 %v152
    %171 = vmatmul.bf16.gmra.mxu0 %v161
    %v172 = vpop.f32.mrf.mxu0
    %v173 = vadd.f32 %v134, %v172
    %v174 = vpop.f32.mrf.mxu0
    %175 = vdwg.mxu0
    %176 = vst [vmem:[#allocation2] sm:$0xff] %v173
    // Predicated region
    $region30: #{mlp_forward.1} parent=1 // pred_check
      _
    $region31: #{mlp_forward.1} parent=1 // pred_check_branch
      %178 = sbr.rel (0) target = $region33
    $region32: #{mlp_forward.1} parent=1 // pred_region
      %180 = vsyncadd [#allocation3], 0
      %s182 = sshll.u32 [#allocation2], 4
      %s183 = int_to_ptr.vmem [resolvable:$true] %s182
      %s184 = sshll.u32 %s7, 4
      %s185 = int_to_ptr.hbm [resolvable:$true] %s184
      %187 = dma.vmem_to_hbm [thread:$0]  %s183, 128, %s185, [#allocation3]
    $region33: #{mlp_forward.1} parent=1 // pred_fallthru
      _
    // Predicated region
    $region34: #{mlp_forward.1} parent=1 // pred_check
      _
    $region35: #{mlp_forward.1} parent=1 // pred_check_branch
      %189 = sbr.rel (0) target = $region37
    $region36: #{mlp_forward.1} parent=1 // pred_region
      %191 = dma.done [#allocation3], 128
    $region37: #{mlp_forward.1} parent=1 // pred_fallthru
      _
    %192 = vsyncpa [#allocation3], 1

// kernel: mlp_forward.1
$region0: #{mlp_forward.1}
  #allocation0 [shape = 'u32[]', space=smem, size = 0x4, offset = 0x4, fixed_abs, tag = 'smem constant byte address 0x4 - core index']
  #allocation1 [shape = 'u32[72,128]{1,0:T(1,128)}', space=vmem, size = 0x9000, scoped, tag = 'internal scratch']
  %s0 = inlined_call_operand.vmem [shape: f32[8,32], index: 0, kind: input, shape index: {}]
  %s1 = inlined_call_operand.vmem [shape: bf16[32,64], index: 1, kind: input, shape index: {}]
  %s2 = inlined_call_operand.vmem [shape: f32[1,64], index: 2, kind: input, shape index: {}]
  %s3 = inlined_call_operand.vmem [shape: bf16[64,64], index: 3, kind: input, shape index: {}]
  %s4 = inlined_call_operand.vmem [shape: f32[1,64], index: 4, kind: input, shape index: {}]
  %s5 = inlined_call_operand.vmem [shape: bf16[64,128], index: 5, kind: input, shape index: {}]
  %s6 = inlined_call_operand.vmem [shape: f32[1,128], index: 6, kind: input, shape index: {}]
  %s7 = inlined_call_operand.hbm [shape: f32[8,128], index: 7, kind: output, shape index: {}]
  %s8 = sld [smem:[#allocation0]]
  $region38: #{mlp_forward.1} parent=0
    _
  %s10 = ssub.s32 1, %s8
  %s11 = scalar_select 0, %s10, %s8
  $region1: #{mlp_forward.1} parent=0
    #allocation2 [shape = 'u8[4096]{0}', space=vmem, size = 0x1000, scoped, tag = 'output window, operand 0, single buffered']
    #allocation3 [shape = 's32[1]{0}', space=sflag, size = 0x4, scoped, tag = 'scoped memory for mlp_forward.1']
    %12 = vsyncpa [#allocation3], 0
    // Predicated region
    $region2: #{mlp_forward.1} parent=1 // pred_check
      _
    $region3: #{mlp_forward.1} parent=1 // pred_check_branch
      %14 = sbr.rel (0) target = $region5
    $region4: #{mlp_forward.1} parent=1 // pred_region
      _
    $region5: #{mlp_forward.1} parent=1 // pred_fallthru
      _
    // Predicated region
    $region6: #{mlp_forward.1} parent=1 // pred_check
      _
    $region7: #{mlp_forward.1} parent=1 // pred_check_branch
      %16 = sbr.rel (0) target = $region9
    $region8: #{mlp_forward.1} parent=1 // pred_region
      _
    $region9: #{mlp_forward.1} parent=1 // pred_fallthru
      _
    // Predicated region
    $region10: #{mlp_forward.1} parent=1 // pred_check
      _
    $region11: #{mlp_forward.1} parent=1 // pred_check_branch
      %18 = sbr.rel (0) target = $region13
    $region12: #{mlp_forward.1} parent=1 // pred_region
      _
    $region13: #{mlp_forward.1} parent=1 // pred_fallthru
      _
    // Predicated region
    $region14: #{mlp_forward.1} parent=1 // pred_check
      _
    $region15: #{mlp_forward.1} parent=1 // pred_check_branch
      %20 = sbr.rel (0) target = $region17
    $region16: #{mlp_forward.1} parent=1 // pred_region
      _
    $region17: #{mlp_forward.1} parent=1 // pred_fallthru
      _
    // Predicated region
    $region18: #{mlp_forward.1} parent=1 // pred_check
      _
    $region19: #{mlp_forward.1} parent=1 // pred_check_branch
      %22 = sbr.rel (0) target = $region21
    $region20: #{mlp_forward.1} parent=1 // pred_region
      _
    $region21: #{mlp_forward.1} parent=1 // pred_fallthru
      _
    // Predicated region
    $region22: #{mlp_forward.1} parent=1 // pred_check
      _
    $region23: #{mlp_forward.1} parent=1 // pred_check_branch
      %24 = sbr.rel (0) target = $region25
    $region24: #{mlp_forward.1} parent=1 // pred_region
      _
    $region25: #{mlp_forward.1} parent=1 // pred_fallthru
      _
    // Predicated region
    $region26: #{mlp_forward.1} parent=1 // pred_check
      _
    $region27: #{mlp_forward.1} parent=1 // pred_check_branch
      %26 = sbr.rel (0) target = $region29
    $region28: #{mlp_forward.1} parent=1 // pred_region
      _
    $region29: #{mlp_forward.1} parent=1 // pred_fallthru
      _
    %v28 = vld [vmem:[%s0] sm:$0xff]
    %v29 = vld [vmem:[%s1] sm:$0xf]
    %v30 = vld [vmem:[%s1 + $0x4] sm:$0xf]
    %v31 = vld [vmem:[%s1 + $0x8] sm:$0xf]
    %v32 = vld [vmem:[%s1 + $0xc] sm:$0xf]
    %v33 = vld [vmem:[%s2] sm:$0x1]
    %v34 = vpack.c.bf16 %v28, %v28
    %v36 = vperm.slane %v33, 0
    %v42 = vunpack.c.l.b16 %v29
    %v43 = vunpack.c.l.b16 %v30
    %v44 = vunpack.c.l.b16 %v31
    %v45 = vunpack.c.l.b16 %v32
    %v46 = vpack.c.b16 %v43, %v42
    %v47 = vpack.c.b16 %v45, %v44
    %vm50 = vcmask 261120
    %v52 = vsel %vm50, %v34, 0
    %54 = vmatpush.bf16.msra.mxu0 0
    %55 = vmatpush.bf16.msra.mxu0 0
    %56 = vmatpush.bf16.msra.mxu0 0
    %57 = vmatpush.bf16.msra.mxu0 0
    %58 = vmatpush.bf16.msra.mxu0 0
    %59 = vmatpush.bf16.msra.mxu0 0
    %60 = vmatpush.bf16.msra.mxu0 %v47
    %61 = vmatpush.bf16.msra.mxu0 %v46
    %62 = vmatmul.bf16.gmra.mxu0 %v52
    %v63 = vpop.f32.mrf.mxu0
    %v64 = vadd.f32 %v36, %v63
    %v65 = vpop.f32.mrf.mxu0
    %66 = vdwg.mxu0
    %v67 = vmax.f32 %v64, 0.0
    %v68 = vld [vmem:[%s3] sm:$0xf]
    %v69 = vld [vmem:[%s3 + $0x4] sm:$0xf]
    %v70 = vld [vmem:[%s3 + $0x8] sm:$0xf]
    %v71 = vld [vmem:[%s3 + $0xc] sm:$0xf]
    %v72 = vld [vmem:[%s3 + $0x10] sm:$0xf]
    %v73 = vld [vmem:[%s3 + $0x14] sm:$0xf]
    %v74 = vld [vmem:[%s3 + $0x18] sm:$0xf]
    %v75 = vld [vmem:[%s3 + $0x1c] sm:$0xf]
    %v76 = vld [vmem:[%s4] sm:$0x1]
    %v77 = vpack.c.bf16 %v67, %v67
    %v79 = vperm.slane %v76, 0
    %v89 = vunpack.c.l.b16 %v68
    %v90 = vunpack.c.l.b16 %v69
    %v91 = vunpack.c.l.b16 %v70
    %v92 = vunpack.c.l.b16 %v71
    %v93 = vunpack.c.l.b16 %v72
    %v94 = vunpack.c.l.b16 %v73
    %v95 = vunpack.c.l.b16 %v74
    %v96 = vunpack.c.l.b16 %v75
    %v97 = vpack.c.b16 %v90, %v89
    %v98 = vpack.c.b16 %v92, %v91
    %v99 = vpack.c.b16 %v94, %v93
    %v100 = vpack.c.b16 %v96, %v95
    %vm105 = vcmask 523264
    %v107 = vsel %vm105, %v77, 0
    %109 = vmatpush.bf16.msra.mxu0 0
    %110 = vmatpush.bf16.msra.mxu0 0
    %111 = vmatpush.bf16.msra.mxu0 0
    %112 = vmatpush.bf16.msra.mxu0 0
    %113 = vmatpush.bf16.msra.mxu0 %v100
    %114 = vmatpush.bf16.msra.mxu0 %v99
    %115 = vmatpush.bf16.msra.mxu0 %v98
    %116 = vmatpush.bf16.msra.mxu0 %v97
    %117 = vmatmul.bf16.gmra.mxu0 %v107
    %v118 = vpop.f32.mrf.mxu0
    %v119 = vadd.f32 %v79, %v118
    %v120 = vpop.f32.mrf.mxu0
    %121 = vdwg.mxu0
    %v122 = vmax.f32 %v119, 0.0
    %v123 = vld [vmem:[%s5] sm:$0xf]
    %v124 = vld [vmem:[%s5 + $0x4] sm:$0xf]
    %v125 = vld [vmem:[%s5 + $0x8] sm:$0xf]
    %v126 = vld [vmem:[%s5 + $0xc] sm:$0xf]
    %v127 = vld [vmem:[%s5 + $0x10] sm:$0xf]
    %v128 = vld [vmem:[%s5 + $0x14] sm:$0xf]
    %v129 = vld [vmem:[%s5 + $0x18] sm:$0xf]
    %v130 = vld [vmem:[%s5 + $0x1c] sm:$0xf]
    %v131 = vld [vmem:[%s6] sm:$0x1]
    %v132 = vpack.c.bf16 %v122, %v122
    %v134 = vperm.slane %v131, 0
    %v144 = vunpack.c.l.b16 %v123
    %v145 = vunpack.c.l.b16 %v124
    %v146 = vunpack.c.l.b16 %v125
    %v147 = vunpack.c.l.b16 %v126
    %v148 = vunpack.c.l.b16 %v127
    %v149 = vunpack.c.l.b16 %v128
    %v150 = vunpack.c.l.b16 %v129
    %v151 = vunpack.c.l.b16 %v130
    %v152 = vpack.c.b16 %v145, %v144
    %v153 = vpack.c.b16 %v147, %v146
    %v154 = vpack.c.b16 %v149, %v148
    %v155 = vpack.c.b16 %v151, %v150
    %v161 = vsel %vm105, %v132, 0
    %163 = vmatpush.bf16.msra.mxu0 0
    %164 = vmatpush.bf16.msra.mxu0 0
    %165 = vmatpush.bf16.msra.mxu0 0
    %166 = vmatpush.bf16.msra.mxu0 0
    %167 = vmatpush.bf16.msra.mxu0 %v155
    %168 = vmatpush.bf16.msra.mxu0 %v154
    %169 = vmatpush.bf16.msra.mxu0 %v153
    %170 = vmatpush.bf16.msra.mxu0 %v152
    %171 = vmatmul.bf16.gmra.mxu0 %v161
    %v172 = vpop.f32.mrf.mxu0
    %v173 = vadd.f32 %v134, %v172
    %v174 = vpop.f32.mrf.mxu0
    %175 = vdwg.mxu0
    %176 = vst [vmem:[#allocation2] sm:$0xff] %v173
    // Predicated region
    $region30: #{mlp_forward.1} parent=1 // pred_check
      _
    $region31: #{mlp_forward.1} parent=1 // pred_check_branch
      %178 = sbr.rel (0) target = $region33
    $region32: #{mlp_forward.1} parent=1 // pred_region
      %180 = vsyncadd [#allocation3], 0
      %s182 = sshll.u32 [#allocation2], 4
      %s183 = int_to_ptr.vmem [resolvable:$true] %s182
      %s184 = sshll.u32 %s7, 4
      %s185 = int_to_ptr.hbm [resolvable:$true] %s184
      %187 = dma.vmem_to_hbm [thread:$0]  %s183, 128, %s185, [#allocation3]
    $region33: #{mlp_forward.1} parent=1 // pred_fallthru
      _
    // Predicated region
    $region34: #{mlp_forward.1} parent=1 // pred_check
      _
    $region35: #{mlp_forward.1} parent=1 // pred_check_branch
      %189 = sbr.rel (0) target = $region37
    $region36: #{mlp_forward.1} parent=1 // pred_region
      %191 = dma.done [#allocation3], 128
    $region37: #{mlp_forward.1} parent=1 // pred_fallthru
      _
    %192 = vsyncpa [#allocation3], 1

</llo_original>
